<compile_context>
chip_gen: v7x
topology: tpu7x:2x2x1
jax: 0.10.0
libtpu: 0.0.40
codegen_flags: <defaults>
</compile_context>

<pallas_src>
import math

import jax
import jax.numpy as jnp
from jax.experimental import pallas as pl
from jax.experimental.pallas import tpu as pltpu


def _round_up(x, n):
    return ((x + n - 1) // n) * n


def _vmem_capacity_bytes():
    """Physical per-core VMEM; conservative fallback if the query is unavailable."""
    try:
        return int(pltpu.get_tpu_info().vmem_capacity_bytes)
    except Exception:
        return 64 * 1024 * 1024  # smallest per-core VMEM of current generations (v7x)


def _resident_vmem_bytes(tm, tn, grid_n, k_pad, r_pad, x_bytes, o_bytes, w_bytes):
    """Honest per-step VMEM footprint of the kernel for a given tiling."""
    w2_bufs = 1 if grid_n == 1 else 2            # resident vs. streamed per N slab
    return (2 * tm * k_pad * x_bytes             # x tile, double-buffered
            + 2 * tm * tn * o_bytes              # out tile, double-buffered
            + 1 * k_pad * r_pad * w_bytes        # W1^T, single-buffered resident
            + w2_bufs * r_pad * tn * w_bytes     # W2^T slab
            + w2_bufs * tn * 4                   # bias slab (f32)
            + tm * k_pad * w_bytes               # in-kernel bf16 copy of x tile
            + tm * r_pad * 4                     # h (f32 accumulator)
            + tm * r_pad * w_bytes               # h cast to bf16 for 2nd matmul
            + tm * tn * 4)                       # y (f32) before bias + cast


def _choose_tiles(m, k_pad, r_pad, n_pad, x_bytes, o_bytes, w_bytes, budget):
    """Pick (tm, tn) that fits the VMEM budget; MXU/lane-friendly granules."""
    m8 = _round_up(max(m, 1), 8)
    if m8 <= 256:
        tm_candidates = [m8]                     # small M: one tile, no waste
    else:
        cap = min(1024, _round_up(m8, 128))
        tm_candidates = [t for t in (1024, 512, 256, 128) if t <= cap] or [128]

    tn_candidates = [n_pad]
    t = n_pad
    while t > 512 and (t // 2) % 128 == 0:
        t //= 2
        tn_candidates.append(t)

    choice = None
    for tn in tn_candidates:                     # prefer widest (resident W2^T)
        g_n = n_pad // tn
        for tm in tm_candidates:                 # then biggest M tile that fits
            if _resident_vmem_bytes(tm, tn, g_n, k_pad, r_pad,
                                    x_bytes, o_bytes, w_bytes) <= budget:
                choice = (tm, tn)
                break
        if choice is not None:
            break
    if choice is None:                           # nothing fits: take smallest tiles
        choice = (tm_candidates[-1], tn_candidates[-1])
    tm, tn = choice

    # v7x megacore: with a single total grid step one TensorCore idles; split N.
    if m8 <= tm and tn == n_pad and n_pad >= 256 and (n_pad // 2) % 128 == 0:
        tn = n_pad // 2
    return tm, tn


def _loralin_kernel(x_ref, w1t_ref, w2t_ref, b_ref, o_ref):
    # x_ref:   (tm, Kp)  input tile in its native dtype (cast to bf16 here, so
    #                    no separate pad/cast HBM pass is needed in the wrapper)
    # w1t_ref: (Kp, Rp)  W1^T, zero-padded, bf16, single-buffered resident
    # w2t_ref: (Rp, tn)  W2^T slab, zero-padded, bf16
    # b_ref:   (1, tn)   bias slab, f32
    # o_ref:   (tm, tn)  output tile (lane-dense, tn % 128 == 0)
    x = x_ref[...].astype(w1t_ref.dtype)
    h = jnp.dot(x, w1t_ref[...], preferred_element_type=jnp.float32)
    y = jnp.dot(h.astype(w2t_ref.dtype), w2t_ref[...],
                preferred_element_type=jnp.float32)
    o_ref[...] = (y + b_ref[...]).astype(o_ref.dtype)


def prepare_loralin_weights(w1, w2, b=None, compute_dtype=jnp.bfloat16):
    """One-time weight prep: transpose + zero-pad to 128 granules + cast.

    w1: (rank, in_features), w2: (out_features, rank), b: (out_features,) or None.
    Returns (w1t_pad, w2t_pad, bias_pad_2d, in_features, out_features).
    """
    rank, in_features = w1.shape
    out_features = w2.shape[0]
    k_pad = _round_up(in_features, 128)
    r_pad = _round_up(rank, 128)
    n_pad = _round_up(out_features, 128)

    w1t = jnp.pad(w1.T.astype(compute_dtype),
                  ((0, k_pad - in_features), (0, r_pad - rank)))
    w2t = jnp.pad(w2.T.astype(compute_dtype),
                  ((0, r_pad - rank), (0, n_pad - out_features)))
    if b is None:
        b = jnp.zeros((out_features,), jnp.float32)
    b2d = jnp.pad(b.astype(jnp.float32).reshape(1, out_features),
                  ((0, 0), (0, n_pad - out_features)))
    return w1t, w2t, b2d, in_features, out_features


def loralin_forward(x, params, *, out_dtype=None, tm=None, tn=None):
    """x: (..., in_features); params from prepare_loralin_weights."""
    w1t, w2t, b2d, in_features, out_features = params
    k_pad, r_pad = w1t.shape
    n_pad = w2t.shape[1]
    w_bytes = jnp.dtype(w1t.dtype).itemsize
    out_dtype = jnp.dtype(out_dtype) if out_dtype is not None else x.dtype
    x_bytes = jnp.dtype(x.dtype).itemsize
    o_bytes = jnp.dtype(out_dtype).itemsize

    lead = x.shape[:-1]
    m = math.prod(lead) if lead else 1
    x2d = x.reshape(m, in_features)
    m8 = _round_up(max(m, 1), 8)

    # --- generation-aware tile choice & VMEM budget --------------------------
    capacity = _vmem_capacity_bytes()
    budget = int(capacity * 0.70)
    auto_tm, auto_tn = _choose_tiles(m, k_pad, r_pad, n_pad,
                                     x_bytes, o_bytes, w_bytes, budget)
    tm = auto_tm if tm is None else int(tm)
    tn = auto_tn if tn is None else int(tn)
    tm = min(_round_up(max(tm, 8), 8), m8)
    tn = _round_up(max(tn, 128), 128)
    if tn > n_pad or n_pad % tn != 0:
        tn = n_pad
    m_pad = _round_up(m8, tm)
    grid_m = m_pad // tm
    grid_n = n_pad // tn

    resident = _resident_vmem_bytes(tm, tn, grid_n, k_pad, r_pad,
                                    x_bytes, o_bytes, w_bytes)
    vmem_limit = int(min(capacity * 0.92,
                         max(resident * 3 // 2, 32 * 1024 * 1024)))

    # --- pad input only if needed (native dtype; bf16 cast happens in-kernel) -
    if (m_pad - m) or (k_pad - in_features):
        x2d = jnp.pad(x2d, ((0, m_pad - m), (0, k_pad - in_features)))

    w2_reads = 1 if grid_n == 1 else grid_m
    cost = pl.CostEstimate(
        flops=2 * m_pad * k_pad * r_pad * grid_n + 2 * m_pad * r_pad * n_pad,
        transcendentals=0,
        bytes_accessed=int(m_pad * k_pad * x_bytes
                           + k_pad * r_pad * w_bytes
                           + w2_reads * r_pad * n_pad * w_bytes
                           + n_pad * 4
                           + m_pad * n_pad * o_bytes),
    )

    def _call(use_buffer_hints):
        def spec(shape, index_map, bufs=None):
            if use_buffer_hints and bufs is not None:
                return pl.BlockSpec(shape, index_map,
                                    pipeline_mode=pl.Buffered(bufs))
            return pl.BlockSpec(shape, index_map)

        # Constant-index blocks are DMA'd once; single-buffer them (halves the
        # resident-weight VMEM). W2^T/bias are only constant when grid_n == 1.
        w2_bufs = 1 if grid_n == 1 else None
        grid_spec = pltpu.PrefetchScalarGridSpec(
            num_scalar_prefetch=0,
            grid=(grid_m, grid_n),
            in_specs=[
                spec((tm, k_pad), lambda i, j: (i, 0)),                # x tile
                spec((k_pad, r_pad), lambda i, j: (0, 0), bufs=1),     # W1^T
                spec((r_pad, tn), lambda i, j: (0, j), bufs=w2_bufs),  # W2^T slab
                spec((1, tn), lambda i, j: (0, j), bufs=w2_bufs),      # bias slab
            ],
            out_specs=pl.BlockSpec((tm, tn), lambda i, j: (i, j)),
        )
        return pl.pallas_call(
            _loralin_kernel,
            out_shape=jax.ShapeDtypeStruct((m_pad, n_pad), out_dtype),
            grid_spec=grid_spec,
            compiler_params=pltpu.CompilerParams(
                # Both axes independent -> megacore sharding on v7x.
                dimension_semantics=("parallel", "parallel"),
                vmem_limit_bytes=vmem_limit,
            ),
            cost_estimate=cost,
        )(x2d, w1t, w2t, b2d)

    try:
        out = _call(True)
    except Exception:
        # Fallback for environments without BlockSpec.pipeline_mode / Buffered(1).
        out = _call(False)

    return out[:m, :out_features].reshape(*lead, out_features)


def make_loralin_params(key, in_features, out_features, rank_ratio=0.2, bias=True):
    """Deterministic synthetic init mirroring the module's parameter shapes."""
    rank = max(2, int(min(in_features, out_features) * rank_ratio))
    k1, k2, k3 = jax.random.split(key, 3)
    # Kaiming-uniform-ish bounds like nn.Linear default init.
    bound1 = 1.0 / jnp.sqrt(in_features)
    bound2 = 1.0 / jnp.sqrt(rank)
    w1 = jax.random.uniform(k1, (rank, in_features), jnp.float32, -bound1, bound1)
    w2 = jax.random.uniform(k2, (out_features, rank), jnp.float32, -bound2, bound2)
    if bias:
        b = jax.random.uniform(k3, (out_features,), jnp.float32, -bound2, bound2)
    else:
        b = jnp.zeros((out_features,), jnp.float32)
    return w1, w2, b


if __name__ == "__main__":
    key = jax.random.PRNGKey(0)
    kx, kp = jax.random.split(key)

    batch, seq = 2, 8
    in_features, out_features = 32, 64          # rank = max(2, int(32*0.2)) = 6
    w1, w2, b = make_loralin_params(kp, in_features, out_features)

    x = jax.random.normal(kx, (batch, seq, in_features), jnp.float32)

    # Prepare (transpose/pad/cast) weights ONCE, outside the per-call forward.
    params = prepare_loralin_weights(w1, w2, b)          # bf16 compute dtype

    y = jax.block_until_ready(loralin_forward(x, params))

    # Pure-JAX f32 reference; bf16 matmul inputs => loosened tolerance.
    y_ref = (x @ w1.T) @ w2.T + b
    assert y.shape == (batch, seq, out_features)
    assert jnp.allclose(y, y_ref, atol=2e-2, rtol=2e-2), "mismatch vs reference"

    # Exercise the multi-tile (grid_m > 1) pipelined path with a forced tiny tile.
    y2 = jax.block_until_ready(loralin_forward(x, params, tm=8))
    assert jnp.allclose(y2, y_ref, atol=2e-2, rtol=2e-2), "mismatch (tiled path)"

    # bf16 output path (halves the M*N writeback stream on real shapes).
    y3 = jax.block_until_ready(
        loralin_forward(x, params, out_dtype=jnp.bfloat16))
    assert jnp.allclose(y3.astype(jnp.float32), y_ref, atol=5e-2, rtol=5e-2), \
        "mismatch (bf16 output path)"

    print("KERNEL_OK")
</pallas_src>

<mosaic_0001>
module attributes {stable_mosaic.version = 11 : i64} {
  func.func @_loralin_kernel(%arg0: i32, %arg1: i32, %arg2: memref<16x128xf32, #tpu.memory_space<vmem>>, %arg3: memref<128x128xbf16, #tpu.memory_space<vmem>>, %arg4: memref<128x128xbf16, #tpu.memory_space<vmem>>, %arg5: memref<1x128xf32, #tpu.memory_space<vmem>>, %arg6: memref<16x128xf32, #tpu.memory_space<vmem>>) attributes {dimension_semantics = [#tpu.dimension_semantics<parallel>, #tpu.dimension_semantics<parallel>], iteration_bounds = array<i64: 1, 1>, scalar_prefetch = 0 : i64, scratch_operands = 0 : i64, tpu.core_type = #tpu.core_type<tc>, window_params = [{transform_indices = @transform_0, window_bounds = array<i64: 16, 128>}, {pipeline_mode = #tpu.pipeline_mode<synchronous>, transform_indices = @transform_1, window_bounds = array<i64: 128, 128>}, {pipeline_mode = #tpu.pipeline_mode<synchronous>, transform_indices = @transform_2, window_bounds = array<i64: 128, 128>}, {pipeline_mode = #tpu.pipeline_mode<synchronous>, transform_indices = @transform_3, window_bounds = array<i64: 1, 128>}, {transform_indices = @transform_4, window_bounds = array<i64: 16, 128>}]} {
    %c0 = arith.constant 0 : index
    %c0_0 = arith.constant 0 : index
    %0 = vector.load %arg2[%c0, %c0_0] : memref<16x128xf32, #tpu.memory_space<vmem>>, vector<16x128xf32>
    %1 = arith.truncf %0 : vector<16x128xf32> to vector<16x128xbf16>
    %c0_1 = arith.constant 0 : index
    %c0_2 = arith.constant 0 : index
    %2 = vector.load %arg3[%c0_1, %c0_2] : memref<128x128xbf16, #tpu.memory_space<vmem>>, vector<128x128xbf16>
    %cst = arith.constant dense<0.000000e+00> : vector<16x128xf32>
    %3 = tpu.matmul %1, %2, %cst {dimension_numbers = #tpu.dot_dimension_numbers<[1], [0], [0], [1], [0, 0, 1, 1], [], []>} : vector<16x128xbf16>, vector<128x128xbf16>, vector<16x128xf32> -> vector<16x128xf32>
    %4 = arith.truncf %3 : vector<16x128xf32> to vector<16x128xbf16>
    %c0_3 = arith.constant 0 : index
    %c0_4 = arith.constant 0 : index
    %5 = vector.load %arg4[%c0_3, %c0_4] : memref<128x128xbf16, #tpu.memory_space<vmem>>, vector<128x128xbf16>
    %cst_5 = arith.constant dense<0.000000e+00> : vector<16x128xf32>
    %6 = tpu.matmul %4, %5, %cst_5 {dimension_numbers = #tpu.dot_dimension_numbers<[1], [0], [0], [1], [0, 0, 1, 1], [], []>} : vector<16x128xbf16>, vector<128x128xbf16>, vector<16x128xf32> -> vector<16x128xf32>
    %c0_6 = arith.constant 0 : index
    %c0_7 = arith.constant 0 : index
    %7 = vector.load %arg5[%c0_6, %c0_7] : memref<1x128xf32, #tpu.memory_space<vmem>>, vector<1x128xf32>
    %8 = vector.broadcast %7 : vector<1x128xf32> to vector<16x128xf32>
    %9 = arith.addf %6, %8 : vector<16x128xf32>
    %c0_8 = arith.constant 0 : index
    %c0_9 = arith.constant 0 : index
    %10 = vector.load %arg6[%c0_8, %c0_9] : memref<16x128xf32, #tpu.memory_space<vmem>>, vector<16x128xf32>
    tpu.vector_store %arg6[%c0_8, %c0_9], %9 {strides = array<i32>} : memref<16x128xf32, #tpu.memory_space<vmem>>, vector<16x128xf32>,
    return
  }
  func.func @transform_0(%arg0: i32, %arg1: i32) -> (i32, i32) {
    %c0_i32 = arith.constant 0 : i32
    %c0_i32_0 = arith.constant 0 : i32
    return %arg0, %c0_i32 : i32, i32
  }
  func.func @transform_1(%arg0: i32, %arg1: i32) -> (i32, i32) {
    %c0_i32 = arith.constant 0 : i32
    %c0_i32_0 = arith.constant 0 : i32
    %c0_i32_1 = arith.constant 0 : i32
    return %c0_i32, %c0_i32_0 : i32, i32
  }
  func.func @transform_2(%arg0: i32, %arg1: i32) -> (i32, i32) {
    %c0_i32 = arith.constant 0 : i32
    %c0_i32_0 = arith.constant 0 : i32
    return %c0_i32, %arg1 : i32, i32
  }
  func.func @transform_3(%arg0: i32, %arg1: i32) -> (i32, i32) {
    %c0_i32 = arith.constant 0 : i32
    %c0_i32_0 = arith.constant 0 : i32
    return %c0_i32, %arg1 : i32, i32
  }
  func.func @transform_4(%arg0: i32, %arg1: i32) -> (i32, i32) {
    %c0_i32 = arith.constant 0 : i32
    return %arg0, %arg1 : i32, i32
  }
}

module attributes {stable_mosaic.version = 11 : i64} {
  func.func @_loralin_kernel(%arg0: i32, %arg1: i32, %arg2: memref<16x128xf32, #tpu.memory_space<vmem>>, %arg3: memref<128x128xbf16, #tpu.memory_space<vmem>>, %arg4: memref<128x128xbf16, #tpu.memory_space<vmem>>, %arg5: memref<1x128xf32, #tpu.memory_space<vmem>>, %arg6: memref<16x128xf32, #tpu.memory_space<vmem>>) attributes {dimension_semantics = [#tpu.dimension_semantics<parallel>, #tpu.dimension_semantics<parallel>], iteration_bounds = array<i64: 1, 1>, scalar_prefetch = 0 : i64, scratch_operands = 0 : i64, tpu.core_type = #tpu.core_type<tc>, window_params = [{transform_indices = @transform_0, window_bounds = array<i64: 16, 128>}, {pipeline_mode = #tpu.pipeline_mode<synchronous>, transform_indices = @transform_1, window_bounds = array<i64: 128, 128>}, {transform_indices = @transform_2, window_bounds = array<i64: 128, 128>}, {transform_indices = @transform_3, window_bounds = array<i64: 1, 128>}, {transform_indices = @transform_4, window_bounds = array<i64: 16, 128>}]} {
    %c0 = arith.constant 0 : index
    %c0_0 = arith.constant 0 : index
    %0 = vector.load %arg2[%c0, %c0_0] : memref<16x128xf32, #tpu.memory_space<vmem>>, vector<16x128xf32>
    %1 = arith.truncf %0 : vector<16x128xf32> to vector<16x128xbf16>
    %c0_1 = arith.constant 0 : index
    %c0_2 = arith.constant 0 : index
    %2 = vector.load %arg3[%c0_1, %c0_2] : memref<128x128xbf16, #tpu.memory_space<vmem>>, vector<128x128xbf16>
    %cst = arith.constant dense<0.000000e+00> : vector<16x128xf32>
    %3 = tpu.matmul %1, %2, %cst {dimension_numbers = #tpu.dot_dimension_numbers<[1], [0], [0], [1], [0, 0, 1, 1], [], []>} : vector<16x128xbf16>, vector<128x128xbf16>, vector<16x128xf32> -> vector<16x128xf32>
    %4 = arith.truncf %3 : vector<16x128xf32> to vector<16x128xbf16>
    %c0_3 = arith.constant 0 : index
    %c0_4 = arith.constant 0 : index
    %5 = vector.load %arg4[%c0_3, %c0_4] : memref<128x128xbf16, #tpu.memory_space<vmem>>, vector<128x128xbf16>
    %cst_5 = arith.constant dense<0.000000e+00> : vector<16x128xf32>
    %6 = tpu.matmul %4, %5, %cst_5 {dimension_numbers = #tpu.dot_dimension_numbers<[1], [0], [0], [1], [0, 0, 1, 1], [], []>} : vector<16x128xbf16>, vector<128x128xbf16>, vector<16x128xf32> -> vector<16x128xf32>
    %c0_6 = arith.constant 0 : index
    %c0_7 = arith.constant 0 : index
    %7 = vector.load %arg5[%c0_6, %c0_7] : memref<1x128xf32, #tpu.memory_space<vmem>>, vector<1x128xf32>
    %8 = vector.broadcast %7 : vector<1x128xf32> to vector<16x128xf32>
    %9 = arith.addf %6, %8 : vector<16x128xf32>
    %c0_8 = arith.constant 0 : index
    %c0_9 = arith.constant 0 : index
    %10 = vector.load %arg6[%c0_8, %c0_9] : memref<16x128xf32, #tpu.memory_space<vmem>>, vector<16x128xf32>
    tpu.vector_store %arg6[%c0_8, %c0_9], %9 {strides = array<i32>} : memref<16x128xf32, #tpu.memory_space<vmem>>, vector<16x128xf32>,
    return
  }
  func.func @transform_0(%arg0: i32, %arg1: i32) -> (i32, i32) {
    %c0_i32 = arith.constant 0 : i32
    %c0_i32_0 = arith.constant 0 : i32
    return %arg0, %c0_i32 : i32, i32
  }
  func.func @transform_1(%arg0: i32, %arg1: i32) -> (i32, i32) {
    %c0_i32 = arith.constant 0 : i32
    %c0_i32_0 = arith.constant 0 : i32
    %c0_i32_1 = arith.constant 0 : i32
    return %c0_i32, %c0_i32_0 : i32, i32
  }
  func.func @transform_2(%arg0: i32, %arg1: i32) -> (i32, i32) {
    %c0_i32 = arith.constant 0 : i32
    %c0_i32_0 = arith.constant 0 : i32
    return %c0_i32, %arg1 : i32, i32
  }
  func.func @transform_3(%arg0: i32, %arg1: i32) -> (i32, i32) {
    %c0_i32 = arith.constant 0 : i32
    %c0_i32_0 = arith.constant 0 : i32
    return %c0_i32, %arg1 : i32, i32
  }
  func.func @transform_4(%arg0: i32, %arg1: i32) -> (i32, i32) {
    %c0_i32 = arith.constant 0 : i32
    return %arg0, %arg1 : i32, i32
  }
}

</mosaic_0001>

<llo_original>
// kernel: tpu_custom_call.1
$region0: #{tpu_custom_call.1}
  #allocation0 [shape = 'u32[]', space=smem, size = 0x4, offset = 0x4, fixed_abs, tag = 'smem constant byte address 0x4 - core index']
  #allocation1 [shape = 'u32[144,128]{1,0:T(1,128)}', space=vmem, size = 0x12000, scoped, tag = 'internal scratch']
  %s0 = inlined_call_operand.hbm [shape: f32[16,128], index: 0, kind: input, shape index: {}]
  %s1 = inlined_call_operand.hbm [shape: bf16[128,128], index: 1, kind: input, shape index: {}]
  %s2 = inlined_call_operand.hbm [shape: bf16[128,128], index: 2, kind: input, shape index: {}]
  %s3 = inlined_call_operand.vmem [shape: f32[1,128], index: 3, kind: input, shape index: {}]
  %s4 = inlined_call_operand.hbm [shape: f32[16,128], index: 4, kind: output, shape index: {}]
  %s5 = sld [smem:[#allocation0]]
  $region38: #{tpu_custom_call.1} parent=0
    _
  %s7 = ssub.s32 1, %s5
  %s8 = scalar_select 0, %s7, %s5
  $region1: #{tpu_custom_call.1} parent=0
    #allocation2 [shape = 'u8[8192]{0}', space=vmem, size = 0x2000, scoped, tag = 'input window, operand 0, single buffered']
    #allocation3 [shape = 's32[1]{0}', space=sflag, size = 0x4, scoped, tag = 'scoped memory for tpu_custom_call.1']
    #allocation4 [shape = 's32[1]{0}', space=sflag, size = 0x4, scoped, tag = 'scoped memory for tpu_custom_call.1']
    #allocation5 [shape = 'u8[32768]{0}', space=vmem, size = 0x8000, scoped, tag = 'input window, operand 1, single buffered']
    #allocation6 [shape = 's32[1]{0}', space=sflag, size = 0x4, scoped, tag = 'scoped memory for tpu_custom_call.1']
    #allocation7 [shape = 'u8[32768]{0}', space=vmem, size = 0x8000, scoped, tag = 'input window, operand 2, single buffered']
    #allocation8 [shape = 'u8[8192]{0}', space=vmem, size = 0x2000, scoped, tag = 'output window, operand 0, single buffered']
    %9 = vsyncpa [#allocation3], 0
    %10 = vsyncpa [#allocation6], 0
    %11 = vsyncpa [#allocation4], 0
    // Predicated region
    $region2: #{tpu_custom_call.1} parent=1 // pred_check
      _
    $region3: #{tpu_custom_call.1} parent=1 // pred_check_branch
      %13 = sbr.rel (0) target = $region5
    $region4: #{tpu_custom_call.1} parent=1 // pred_region
      %s15 = ssub.s32 256, 256
      %16 = vsyncadd [#allocation3], %s15
      %s17 = sshll.u32 [#allocation2], 4
      %s18 = int_to_ptr.vmem [resolvable:$true] %s17
      %23 = dma.hbm_to_vmem [thread:$0]  %s0, 256, %s18, [#allocation3], 128, 128, 8
    $region5: #{tpu_custom_call.1} parent=1 // pred_fallthru
      _
    // Predicated region
    $region6: #{tpu_custom_call.1} parent=1 // pred_check
      _
    $region7: #{tpu_custom_call.1} parent=1 // pred_check_branch
      %25 = sbr.rel (0) target = $region9
    $region8: #{tpu_custom_call.1} parent=1 // pred_region
      %s27 = ssub.s32 1024, 1024
      %28 = vsyncadd [#allocation6], %s27
      %s29 = sshll.u32 [#allocation5], 4
      %s30 = int_to_ptr.vmem [resolvable:$true] %s29
      %35 = dma.hbm_to_vmem [thread:$0]  %s1, 1024, %s30, [#allocation6], 64, 64, 4
    $region9: #{tpu_custom_call.1} parent=1 // pred_fallthru
      _
    // Predicated region
    $region10: #{tpu_custom_call.1} parent=1 // pred_check
      _
    $region11: #{tpu_custom_call.1} parent=1 // pred_check_branch
      %37 = sbr.rel (0) target = $region13
    $region12: #{tpu_custom_call.1} parent=1 // pred_region
      %s39 = ssub.s32 1024, 1024
      %40 = vsyncadd [#allocation6], %s39
      %s41 = sshll.u32 [#allocation7], 4
      %s42 = int_to_ptr.vmem [resolvable:$true] %s41
      %47 = dma.hbm_to_vmem [thread:$0]  %s2, 1024, %s42, [#allocation6], 64, 64, 4
    $region13: #{tpu_custom_call.1} parent=1 // pred_fallthru
      _
    // Predicated region
    $region14: #{tpu_custom_call.1} parent=1 // pred_check
      _
    $region15: #{tpu_custom_call.1} parent=1 // pred_check_branch
      %49 = sbr.rel (0) target = $region17
    $region16: #{tpu_custom_call.1} parent=1 // pred_region
      _
    $region17: #{tpu_custom_call.1} parent=1 // pred_fallthru
      _
    // Predicated region
    $region18: #{tpu_custom_call.1} parent=1 // pred_check
      _
    $region19: #{tpu_custom_call.1} parent=1 // pred_check_branch
      %51 = sbr.rel (0) target = $region21
    $region20: #{tpu_custom_call.1} parent=1 // pred_region
      %52 = dma.done [#allocation3], 256
    $region21: #{tpu_custom_call.1} parent=1 // pred_fallthru
      _
    // Predicated region
    $region22: #{tpu_custom_call.1} parent=1 // pred_check
      _
    $region23: #{tpu_custom_call.1} parent=1 // pred_check_branch
      %54 = sbr.rel (0) target = $region25
    $region24: #{tpu_custom_call.1} parent=1 // pred_region
      %55 = dma.done [#allocation6], 1024
    $region25: #{tpu_custom_call.1} parent=1 // pred_fallthru
      _
    // Predicated region
    $region26: #{tpu_custom_call.1} parent=1 // pred_check
      _
    $region27: #{tpu_custom_call.1} parent=1 // pred_check_branch
      %57 = sbr.rel (0) target = $region29
    $region28: #{tpu_custom_call.1} parent=1 // pred_region
      %58 = dma.done [#allocation6], 1024
    $region29: #{tpu_custom_call.1} parent=1 // pred_fallthru
      _
    %v60 = vld [vmem:[#allocation2] sm:$0xff]
    %v61 = vld [vmem:[#allocation2 + $0x8] sm:$0xff]
    %v62 = vpack.c.bf16 %v61, %v60
    %v63 = vld [vmem:[#allocation5] sm:$0xf]
    %v64 = vld [vmem:[#allocation5 + $0x4] sm:$0xf]
    %v65 = vld [vmem:[#allocation5 + $0x8] sm:$0xf]
    %v66 = vld [vmem:[#allocation5 + $0xc] sm:$0xf]
    %v67 = vld [vmem:[#allocation5 + $0x10] sm:$0xf]
    %v68 = vld [vmem:[#allocation5 + $0x14] sm:$0xf]
    %v69 = vld [vmem:[#allocation5 + $0x18] sm:$0xf]
    %v70 = vld [vmem:[#allocation5 + $0x1c] sm:$0xf]
    %v71 = vld [vmem:[#allocation5 + $0x20] sm:$0xf]
    %v72 = vld [vmem:[#allocation5 + $0x24] sm:$0xf]
    %v73 = vld [vmem:[#allocation5 + $0x28] sm:$0xf]
    %v74 = vld [vmem:[#allocation5 + $0x2c] sm:$0xf]
    %v75 = vld [vmem:[#allocation5 + $0x30] sm:$0xf]
    %v76 = vld [vmem:[#allocation5 + $0x34] sm:$0xf]
    %v77 = vld [vmem:[#allocation5 + $0x38] sm:$0xf]
    %v78 = vld [vmem:[#allocation5 + $0x3c] sm:$0xf]
    %v95 = vunpack.c.l.b16 %v63
    %v96 = vunpack.c.l.b16 %v64
    %v97 = vunpack.c.l.b16 %v65
    %v98 = vunpack.c.l.b16 %v66
    %v99 = vunpack.c.l.b16 %v67
    %v100 = vunpack.c.l.b16 %v68
    %v101 = vunpack.c.l.b16 %v69
    %v102 = vunpack.c.l.b16 %v70
    %v103 = vunpack.c.l.b16 %v71
    %v104 = vunpack.c.l.b16 %v72
    %v105 = vunpack.c.l.b16 %v73
    %v106 = vunpack.c.l.b16 %v74
    %v107 = vunpack.c.l.b16 %v75
    %v108 = vunpack.c.l.b16 %v76
    %v109 = vunpack.c.l.b16 %v77
    %v110 = vunpack.c.l.b16 %v78
    %v111 = vpack.c.b16 %v96, %v95
    %v112 = vpack.c.b16 %v98, %v97
    %v113 = vpack.c.b16 %v100, %v99
    %v114 = vpack.c.b16 %v102, %v101
    %v115 = vpack.c.b16 %v104, %v103
    %v116 = vpack.c.b16 %v106, %v105
    %v117 = vpack.c.b16 %v108, %v107
    %v118 = vpack.c.b16 %v110, %v109
    %127 = vmatprep.subr.bf16.mxu0 0
    %128 = vmatpush1.bf16.msra.mxu0 %v111
    %129 = vmatprep.subr.bf16.mxu0 0
    %130 = vmatpush1.bf16.msra.mxu0 %v112
    %131 = vmatprep.subr.bf16.mxu0 0
    %132 = vmatpush1.bf16.msra.mxu0 %v113
    %133 = vmatprep.subr.bf16.mxu0 0
    %134 = vmatpush1.bf16.msra.mxu0 %v114
    %135 = vmatprep.subr.bf16.mxu0 0
    %136 = vmatpush1.bf16.msra.mxu0 %v115
    %137 = vmatprep.subr.bf16.mxu0 0
    %138 = vmatpush1.bf16.msra.mxu0 %v116
    %139 = vmatprep.subr.bf16.mxu0 0
    %140 = vmatpush1.bf16.msra.mxu0 %v117
    %141 = vmatprep.subr.bf16.mxu0 0
    %142 = vmatpush1.bf16.msra.mxu0 %v118
    %143 = vmatprep.subr.bf16.mxu0 0
    %144 = vmatpush1.bf16.msra.mxu0 0
    %145 = vmatprep.subr.bf16.mxu0 0
    %146 = vmatpush1.bf16.msra.mxu0 0
    %147 = vmatprep.subr.bf16.mxu0 0
    %148 = vmatpush1.bf16.msra.mxu0 0
    %149 = vmatprep.subr.bf16.mxu0 0
    %150 = vmatpush1.bf16.msra.mxu0 0
    %151 = vmatprep.subr.bf16.mxu0 0
    %152 = vmatpush1.bf16.msra.mxu0 0
    %153 = vmatprep.subr.bf16.mxu0 0
    %154 = vmatpush1.bf16.msra.mxu0 0
    %155 = vmatprep.subr.bf16.mxu0 0
    %156 = vmatpush1.bf16.msra.mxu0 0
    %157 = vmatprep.subr.bf16.mxu0 0
    %158 = vmatpush1.bf16.msra.mxu0 0
    %159 = vmatprep.mubr.bf16.mxu0 0
    %160 = vmatmul.mubr.bf16.gmra.mrb[0].mxu0 %v62
    %v161 = vpop.f32.mrb[0].mxu0
    %v162 = vadd.f32 0.0, %v161
    %v163 = vpop.f32.mrb[0].mxu0
    %v164 = vpop.f32.mrb[0].mxu0
    %v165 = vadd.f32 0.0, %v164
    %v166 = vpop.f32.mrb[0].mxu0
    %167 = vdwg.mxu0
    %v168 = vpack.c.bf16 %v165, %v162
    %v169 = vld [vmem:[#allocation7] sm:$0xf]
    %v170 = vld [vmem:[#allocation7 + $0x4] sm:$0xf]
    %v171 = vld [vmem:[#allocation7 + $0x8] sm:$0xf]
    %v172 = vld [vmem:[#allocation7 + $0xc] sm:$0xf]
    %v173 = vld [vmem:[#allocation7 + $0x10] sm:$0xf]
    %v174 = vld [vmem:[#allocation7 + $0x14] sm:$0xf]
    %v175 = vld [vmem:[#allocation7 + $0x18] sm:$0xf]
    %v176 = vld [vmem:[#allocation7 + $0x1c] sm:$0xf]
    %v177 = vld [vmem:[#allocation7 + $0x20] sm:$0xf]
    %v178 = vld [vmem:[#allocation7 + $0x24] sm:$0xf]
    %v179 = vld [vmem:[#allocation7 + $0x28] sm:$0xf]
    %v180 = vld [vmem:[#allocation7 + $0x2c] sm:$0xf]
    %v181 = vld [vmem:[#allocation7 + $0x30] sm:$0xf]
    %v182 = vld [vmem:[#allocation7 + $0x34] sm:$0xf]
    %v183 = vld [vmem:[#allocation7 + $0x38] sm:$0xf]
    %v184 = vld [vmem:[#allocation7 + $0x3c] sm:$0xf]
    %v185 = vld [vmem:[%s3] sm:$0x1]
    %v187 = vlaneseq
    %v188 = vshrl.u32 %v187, 7
    %v189 = vsub.s32 0, %v188
    %v190 = vrot.slane %v185, %v189
    %v208 = vunpack.c.l.b16 %v169
    %v209 = vunpack.c.l.b16 %v170
    %v210 = vunpack.c.l.b16 %v171
    %v211 = vunpack.c.l.b16 %v172
    %v212 = vunpack.c.l.b16 %v173
    %v213 = vunpack.c.l.b16 %v174
    %v214 = vunpack.c.l.b16 %v175
    %v215 = vunpack.c.l.b16 %v176
    %v216 = vunpack.c.l.b16 %v177
    %v217 = vunpack.c.l.b16 %v178
    %v218 = vunpack.c.l.b16 %v179
    %v219 = vunpack.c.l.b16 %v180
    %v220 = vunpack.c.l.b16 %v181
    %v221 = vunpack.c.l.b16 %v182
    %v222 = vunpack.c.l.b16 %v183
    %v223 = vunpack.c.l.b16 %v184
    %v224 = vpack.c.b16 %v209, %v208
    %v225 = vpack.c.b16 %v211, %v210
    %v226 = vpack.c.b16 %v213, %v212
    %v227 = vpack.c.b16 %v215, %v214
    %v228 = vpack.c.b16 %v217, %v216
    %v229 = vpack.c.b16 %v219, %v218
    %v230 = vpack.c.b16 %v221, %v220
    %v231 = vpack.c.b16 %v223, %v222
    %240 = vmatprep.subr.bf16.mxu0 0
    %241 = vmatpush1.bf16.msra.mxu0 %v224
    %242 = vmatprep.subr.bf16.mxu0 0
    %243 = vmatpush1.bf16.msra.mxu0 %v225
    %244 = vmatprep.subr.bf16.mxu0 0
    %245 = vmatpush1.bf16.msra.mxu0 %v226
    %246 = vmatprep.subr.bf16.mxu0 0
    %247 = vmatpush1.bf16.msra.mxu0 %v227
    %248 = vmatprep.subr.bf16.mxu0 0
    %249 = vmatpush1.bf16.msra.mxu0 %v228
    %250 = vmatprep.subr.bf16.mxu0 0
    %251 = vmatpush1.bf16.msra.mxu0 %v229
    %252 = vmatprep.subr.bf16.mxu0 0
    %253 = vmatpush1.bf16.msra.mxu0 %v230
    %254 = vmatprep.subr.bf16.mxu0 0
    %255 = vmatpush1.bf16.msra.mxu0 %v231
    %256 = vmatprep.subr.bf16.mxu0 0
    %257 = vmatpush1.bf16.msra.mxu0 0
    %258 = vmatprep.subr.bf16.mxu0 0
    %259 = vmatpush1.bf16.msra.mxu0 0
    %260 = vmatprep.subr.bf16.mxu0 0
    %261 = vmatpush1.bf16.msra.mxu0 0
    %262 = vmatprep.subr.bf16.mxu0 0
    %263 = vmatpush1.bf16.msra.mxu0 0
    %264 = vmatprep.subr.bf16.mxu0 0
    %265 = vmatpush1.bf16.msra.mxu0 0
    %266 = vmatprep.subr.bf16.mxu0 0
    %267 = vmatpush1.bf16.msra.mxu0 0
    %268 = vmatprep.subr.bf16.mxu0 0
    %269 = vmatpush1.bf16.msra.mxu0 0
    %270 = vmatprep.subr.bf16.mxu0 0
    %271 = vmatpush1.bf16.msra.mxu0 0
    %272 = vmatprep.mubr.bf16.mxu0 0
    %273 = vmatmul.mubr.bf16.gmra.mrb[0].mxu0 %v168
    %v274 = vpop.f32.mrb[0].mxu0
    %v275 = vadd.f32 %v190, %v274
    %v276 = vpop.f32.mrb[0].mxu0
    %v277 = vpop.f32.mrb[0].mxu0
    %v278 = vadd.f32 %v190, %v277
    %v279 = vpop.f32.mrb[0].mxu0
    %280 = vdwg.mxu0
    %281 = vst [vmem:[#allocation8] sm:$0xff] %v275
    %282 = vst [vmem:[#allocation8 + $0x8] sm:$0xff] %v278
    // Predicated region
    $region30: #{tpu_custom_call.1} parent=1 // pred_check
      _
    $region31: #{tpu_custom_call.1} parent=1 // pred_check_branch
      %284 = sbr.rel (0) target = $region33
    $region32: #{tpu_custom_call.1} parent=1 // pred_region
      %s286 = ssub.s32 256, 256
      %287 = vsyncadd [#allocation4], %s286
      %s288 = sshll.u32 [#allocation8], 4
      %s289 = int_to_ptr.vmem [resolvable:$true] %s288
      %294 = dma.vmem_to_hbm [thread:$0]  %s289, 256, %s4, [#allocation4], 128, 128, 8
    $region33: #{tpu_custom_call.1} parent=1 // pred_fallthru
      _
    // Predicated region
    $region34: #{tpu_custom_call.1} parent=1 // pred_check
      _
    $region35: #{tpu_custom_call.1} parent=1 // pred_check_branch
      %296 = sbr.rel (0) target = $region37
    $region36: #{tpu_custom_call.1} parent=1 // pred_region
      %297 = dma.done [#allocation4], 256
    $region37: #{tpu_custom_call.1} parent=1 // pred_fallthru
      _
    %298 = vsyncpa [#allocation3], 1
    %299 = vsyncpa [#allocation6], 1
    %300 = vsyncpa [#allocation4], 1

// kernel: tpu_custom_call.1
$region0: #{tpu_custom_call.1}
  #allocation0 [shape = 'u32[]', space=smem, size = 0x4, offset = 0x4, fixed_abs, tag = 'smem constant byte address 0x4 - core index']
  #allocation1 [shape = 'u32[144,128]{1,0:T(1,128)}', space=vmem, size = 0x12000, scoped, tag = 'internal scratch']
  %s0 = inlined_call_operand.hbm [shape: f32[16,128], index: 0, kind: input, shape index: {}]
  %s1 = inlined_call_operand.hbm [shape: bf16[128,128], index: 1, kind: input, shape index: {}]
  %s2 = inlined_call_operand.hbm [shape: bf16[128,128], index: 2, kind: input, shape index: {}]
  %s3 = inlined_call_operand.vmem [shape: f32[1,128], index: 3, kind: input, shape index: {}]
  %s4 = inlined_call_operand.hbm [shape: f32[16,128], index: 4, kind: output, shape index: {}]
  %s5 = sld [smem:[#allocation0]]
  $region38: #{tpu_custom_call.1} parent=0
    _
  %s7 = ssub.s32 1, %s5
  %s8 = scalar_select 0, %s7, %s5
  $region1: #{tpu_custom_call.1} parent=0
    #allocation2 [shape = 'u8[8192]{0}', space=vmem, size = 0x2000, scoped, tag = 'input window, operand 0, single buffered']
    #allocation3 [shape = 's32[1]{0}', space=sflag, size = 0x4, scoped, tag = 'scoped memory for tpu_custom_call.1']
    #allocation4 [shape = 's32[1]{0}', space=sflag, size = 0x4, scoped, tag = 'scoped memory for tpu_custom_call.1']
    #allocation5 [shape = 'u8[32768]{0}', space=vmem, size = 0x8000, scoped, tag = 'input window, operand 1, single buffered']
    #allocation6 [shape = 's32[1]{0}', space=sflag, size = 0x4, scoped, tag = 'scoped memory for tpu_custom_call.1']
    #allocation7 [shape = 'u8[32768]{0}', space=vmem, size = 0x8000, scoped, tag = 'input window, operand 2, single buffered']
    #allocation8 [shape = 'u8[8192]{0}', space=vmem, size = 0x2000, scoped, tag = 'output window, operand 0, single buffered']
    %9 = vsyncpa [#allocation3], 0
    %10 = vsyncpa [#allocation6], 0
    %11 = vsyncpa [#allocation4], 0
    // Predicated region
    $region2: #{tpu_custom_call.1} parent=1 // pred_check
      _
    $region3: #{tpu_custom_call.1} parent=1 // pred_check_branch
      %13 = sbr.rel (0) target = $region5
    $region4: #{tpu_custom_call.1} parent=1 // pred_region
      %s15 = ssub.s32 256, 256
      %16 = vsyncadd [#allocation3], %s15
      %s17 = sshll.u32 [#allocation2], 4
      %s18 = int_to_ptr.vmem [resolvable:$true] %s17
      %23 = dma.hbm_to_vmem [thread:$0]  %s0, 256, %s18, [#allocation3], 128, 128, 8
    $region5: #{tpu_custom_call.1} parent=1 // pred_fallthru
      _
    // Predicated region
    $region6: #{tpu_custom_call.1} parent=1 // pred_check
      _
    $region7: #{tpu_custom_call.1} parent=1 // pred_check_branch
      %25 = sbr.rel (0) target = $region9
    $region8: #{tpu_custom_call.1} parent=1 // pred_region
      %s27 = ssub.s32 1024, 1024
      %28 = vsyncadd [#allocation6], %s27
      %s29 = sshll.u32 [#allocation5], 4
      %s30 = int_to_ptr.vmem [resolvable:$true] %s29
      %35 = dma.hbm_to_vmem [thread:$0]  %s1, 1024, %s30, [#allocation6], 64, 64, 4
    $region9: #{tpu_custom_call.1} parent=1 // pred_fallthru
      _
    // Predicated region
    $region10: #{tpu_custom_call.1} parent=1 // pred_check
      _
    $region11: #{tpu_custom_call.1} parent=1 // pred_check_branch
      %37 = sbr.rel (0) target = $region13
    $region12: #{tpu_custom_call.1} parent=1 // pred_region
      %s39 = ssub.s32 1024, 1024
      %40 = vsyncadd [#allocation6], %s39
      %s41 = sshll.u32 [#allocation7], 4
      %s42 = int_to_ptr.vmem [resolvable:$true] %s41
      %47 = dma.hbm_to_vmem [thread:$0]  %s2, 1024, %s42, [#allocation6], 64, 64, 4
    $region13: #{tpu_custom_call.1} parent=1 // pred_fallthru
      _
    // Predicated region
    $region14: #{tpu_custom_call.1} parent=1 // pred_check
      _
    $region15: #{tpu_custom_call.1} parent=1 // pred_check_branch
      %49 = sbr.rel (0) target = $region17
    $region16: #{tpu_custom_call.1} parent=1 // pred_region
      _
    $region17: #{tpu_custom_call.1} parent=1 // pred_fallthru
      _
    // Predicated region
    $region18: #{tpu_custom_call.1} parent=1 // pred_check
      _
    $region19: #{tpu_custom_call.1} parent=1 // pred_check_branch
      %51 = sbr.rel (0) target = $region21
    $region20: #{tpu_custom_call.1} parent=1 // pred_region
      %52 = dma.done [#allocation3], 256
    $region21: #{tpu_custom_call.1} parent=1 // pred_fallthru
      _
    // Predicated region
    $region22: #{tpu_custom_call.1} parent=1 // pred_check
      _
    $region23: #{tpu_custom_call.1} parent=1 // pred_check_branch
      %54 = sbr.rel (0) target = $region25
    $region24: #{tpu_custom_call.1} parent=1 // pred_region
      %55 = dma.done [#allocation6], 1024
    $region25: #{tpu_custom_call.1} parent=1 // pred_fallthru
      _
    // Predicated region
    $region26: #{tpu_custom_call.1} parent=1 // pred_check
      _
    $region27: #{tpu_custom_call.1} parent=1 // pred_check_branch
      %57 = sbr.rel (0) target = $region29
    $region28: #{tpu_custom_call.1} parent=1 // pred_region
      %58 = dma.done [#allocation6], 1024
    $region29: #{tpu_custom_call.1} parent=1 // pred_fallthru
      _
    %v60 = vld [vmem:[#allocation2] sm:$0xff]
    %v61 = vld [vmem:[#allocation2 + $0x8] sm:$0xff]
    %v62 = vpack.c.bf16 %v61, %v60
    %v63 = vld [vmem:[#allocation5] sm:$0xf]
    %v64 = vld [vmem:[#allocation5 + $0x4] sm:$0xf]
    %v65 = vld [vmem:[#allocation5 + $0x8] sm:$0xf]
    %v66 = vld [vmem:[#allocation5 + $0xc] sm:$0xf]
    %v67 = vld [vmem:[#allocation5 + $0x10] sm:$0xf]
    %v68 = vld [vmem:[#allocation5 + $0x14] sm:$0xf]
    %v69 = vld [vmem:[#allocation5 + $0x18] sm:$0xf]
    %v70 = vld [vmem:[#allocation5 + $0x1c] sm:$0xf]
    %v71 = vld [vmem:[#allocation5 + $0x20] sm:$0xf]
    %v72 = vld [vmem:[#allocation5 + $0x24] sm:$0xf]
    %v73 = vld [vmem:[#allocation5 + $0x28] sm:$0xf]
    %v74 = vld [vmem:[#allocation5 + $0x2c] sm:$0xf]
    %v75 = vld [vmem:[#allocation5 + $0x30] sm:$0xf]
    %v76 = vld [vmem:[#allocation5 + $0x34] sm:$0xf]
    %v77 = vld [vmem:[#allocation5 + $0x38] sm:$0xf]
    %v78 = vld [vmem:[#allocation5 + $0x3c] sm:$0xf]
    %v95 = vunpack.c.l.b16 %v63
    %v96 = vunpack.c.l.b16 %v64
    %v97 = vunpack.c.l.b16 %v65
    %v98 = vunpack.c.l.b16 %v66
    %v99 = vunpack.c.l.b16 %v67
    %v100 = vunpack.c.l.b16 %v68
    %v101 = vunpack.c.l.b16 %v69
    %v102 = vunpack.c.l.b16 %v70
    %v103 = vunpack.c.l.b16 %v71
    %v104 = vunpack.c.l.b16 %v72
    %v105 = vunpack.c.l.b16 %v73
    %v106 = vunpack.c.l.b16 %v74
    %v107 = vunpack.c.l.b16 %v75
    %v108 = vunpack.c.l.b16 %v76
    %v109 = vunpack.c.l.b16 %v77
    %v110 = vunpack.c.l.b16 %v78
    %v111 = vpack.c.b16 %v96, %v95
    %v112 = vpack.c.b16 %v98, %v97
    %v113 = vpack.c.b16 %v100, %v99
    %v114 = vpack.c.b16 %v102, %v101
    %v115 = vpack.c.b16 %v104, %v103
    %v116 = vpack.c.b16 %v106, %v105
    %v117 = vpack.c.b16 %v108, %v107
    %v118 = vpack.c.b16 %v110, %v109
    %127 = vmatprep.subr.bf16.mxu0 0
    %128 = vmatpush1.bf16.msra.mxu0 %v111
    %129 = vmatprep.subr.bf16.mxu0 0
    %130 = vmatpush1.bf16.msra.mxu0 %v112
    %131 = vmatprep.subr.bf16.mxu0 0
    %132 = vmatpush1.bf16.msra.mxu0 %v113
    %133 = vmatprep.subr.bf16.mxu0 0
    %134 = vmatpush1.bf16.msra.mxu0 %v114
    %135 = vmatprep.subr.bf16.mxu0 0
    %136 = vmatpush1.bf16.msra.mxu0 %v115
    %137 = vmatprep.subr.bf16.mxu0 0
    %138 = vmatpush1.bf16.msra.mxu0 %v116
    %139 = vmatprep.subr.bf16.mxu0 0
    %140 = vmatpush1.bf16.msra.mxu0 %v117
    %141 = vmatprep.subr.bf16.mxu0 0
    %142 = vmatpush1.bf16.msra.mxu0 %v118
    %143 = vmatprep.subr.bf16.mxu0 0
    %144 = vmatpush1.bf16.msra.mxu0 0
    %145 = vmatprep.subr.bf16.mxu0 0
    %146 = vmatpush1.bf16.msra.mxu0 0
    %147 = vmatprep.subr.bf16.mxu0 0
    %148 = vmatpush1.bf16.msra.mxu0 0
    %149 = vmatprep.subr.bf16.mxu0 0
    %150 = vmatpush1.bf16.msra.mxu0 0
    %151 = vmatprep.subr.bf16.mxu0 0
    %152 = vmatpush1.bf16.msra.mxu0 0
    %153 = vmatprep.subr.bf16.mxu0 0
    %154 = vmatpush1.bf16.msra.mxu0 0
    %155 = vmatprep.subr.bf16.mxu0 0
    %156 = vmatpush1.bf16.msra.mxu0 0
    %157 = vmatprep.subr.bf16.mxu0 0
    %158 = vmatpush1.bf16.msra.mxu0 0
    %159 = vmatprep.mubr.bf16.mxu0 0
    %160 = vmatmul.mubr.bf16.gmra.mrb[0].mxu0 %v62
    %v161 = vpop.f32.mrb[0].mxu0
    %v162 = vadd.f32 0.0, %v161
    %v163 = vpop.f32.mrb[0].mxu0
    %v164 = vpop.f32.mrb[0].mxu0
    %v165 = vadd.f32 0.0, %v164
    %v166 = vpop.f32.mrb[0].mxu0
    %167 = vdwg.mxu0
    %v168 = vpack.c.bf16 %v165, %v162
    %v169 = vld [vmem:[#allocation7] sm:$0xf]
    %v170 = vld [vmem:[#allocation7 + $0x4] sm:$0xf]
    %v171 = vld [vmem:[#allocation7 + $0x8] sm:$0xf]
    %v172 = vld [vmem:[#allocation7 + $0xc] sm:$0xf]
    %v173 = vld [vmem:[#allocation7 + $0x10] sm:$0xf]
    %v174 = vld [vmem:[#allocation7 + $0x14] sm:$0xf]
    %v175 = vld [vmem:[#allocation7 + $0x18] sm:$0xf]
    %v176 = vld [vmem:[#allocation7 + $0x1c] sm:$0xf]
    %v177 = vld [vmem:[#allocation7 + $0x20] sm:$0xf]
    %v178 = vld [vmem:[#allocation7 + $0x24] sm:$0xf]
    %v179 = vld [vmem:[#allocation7 + $0x28] sm:$0xf]
    %v180 = vld [vmem:[#allocation7 + $0x2c] sm:$0xf]
    %v181 = vld [vmem:[#allocation7 + $0x30] sm:$0xf]
    %v182 = vld [vmem:[#allocation7 + $0x34] sm:$0xf]
    %v183 = vld [vmem:[#allocation7 + $0x38] sm:$0xf]
    %v184 = vld [vmem:[#allocation7 + $0x3c] sm:$0xf]
    %v185 = vld [vmem:[%s3] sm:$0x1]
    %v187 = vlaneseq
    %v188 = vshrl.u32 %v187, 7
    %v189 = vsub.s32 0, %v188
    %v190 = vrot.slane %v185, %v189
    %v208 = vunpack.c.l.b16 %v169
    %v209 = vunpack.c.l.b16 %v170
    %v210 = vunpack.c.l.b16 %v171
    %v211 = vunpack.c.l.b16 %v172
    %v212 = vunpack.c.l.b16 %v173
    %v213 = vunpack.c.l.b16 %v174
    %v214 = vunpack.c.l.b16 %v175
    %v215 = vunpack.c.l.b16 %v176
    %v216 = vunpack.c.l.b16 %v177
    %v217 = vunpack.c.l.b16 %v178
    %v218 = vunpack.c.l.b16 %v179
    %v219 = vunpack.c.l.b16 %v180
    %v220 = vunpack.c.l.b16 %v181
    %v221 = vunpack.c.l.b16 %v182
    %v222 = vunpack.c.l.b16 %v183
    %v223 = vunpack.c.l.b16 %v184
    %v224 = vpack.c.b16 %v209, %v208
    %v225 = vpack.c.b16 %v211, %v210
    %v226 = vpack.c.b16 %v213, %v212
    %v227 = vpack.c.b16 %v215, %v214
    %v228 = vpack.c.b16 %v217, %v216
    %v229 = vpack.c.b16 %v219, %v218
    %v230 = vpack.c.b16 %v221, %v220
    %v231 = vpack.c.b16 %v223, %v222
    %240 = vmatprep.subr.bf16.mxu0 0
    %241 = vmatpush1.bf16.msra.mxu0 %v224
    %242 = vmatprep.subr.bf16.mxu0 0
    %243 = vmatpush1.bf16.msra.mxu0 %v225
    %244 = vmatprep.subr.bf16.mxu0 0
    %245 = vmatpush1.bf16.msra.mxu0 %v226
    %246 = vmatprep.subr.bf16.mxu0 0
    %247 = vmatpush1.bf16.msra.mxu0 %v227
    %248 = vmatprep.subr.bf16.mxu0 0
    %249 = vmatpush1.bf16.msra.mxu0 %v228
    %250 = vmatprep.subr.bf16.mxu0 0
    %251 = vmatpush1.bf16.msra.mxu0 %v229
    %252 = vmatprep.subr.bf16.mxu0 0
    %253 = vmatpush1.bf16.msra.mxu0 %v230
    %254 = vmatprep.subr.bf16.mxu0 0
    %255 = vmatpush1.bf16.msra.mxu0 %v231
    %256 = vmatprep.subr.bf16.mxu0 0
    %257 = vmatpush1.bf16.msra.mxu0 0
    %258 = vmatprep.subr.bf16.mxu0 0
    %259 = vmatpush1.bf16.msra.mxu0 0
    %260 = vmatprep.subr.bf16.mxu0 0
    %261 = vmatpush1.bf16.msra.mxu0 0
    %262 = vmatprep.subr.bf16.mxu0 0
    %263 = vmatpush1.bf16.msra.mxu0 0
    %264 = vmatprep.subr.bf16.mxu0 0
    %265 = vmatpush1.bf16.msra.mxu0 0
    %266 = vmatprep.subr.bf16.mxu0 0
    %267 = vmatpush1.bf16.msra.mxu0 0
    %268 = vmatprep.subr.bf16.mxu0 0
    %269 = vmatpush1.bf16.msra.mxu0 0
    %270 = vmatprep.subr.bf16.mxu0 0
    %271 = vmatpush1.bf16.msra.mxu0 0
    %272 = vmatprep.mubr.bf16.mxu0 0
    %273 = vmatmul.mubr.bf16.gmra.mrb[0].mxu0 %v168
    %v274 = vpop.f32.mrb[0].mxu0
    %v275 = vadd.f32 %v190, %v274
    %v276 = vpop.f32.mrb[0].mxu0
    %v277 = vpop.f32.mrb[0].mxu0
    %v278 = vadd.f32 %v190, %v277
    %v279 = vpop.f32.mrb[0].mxu0
    %280 = vdwg.mxu0
    %281 = vst [vmem:[#allocation8] sm:$0xff] %v275
    %282 = vst [vmem:[#allocation8 + $0x8] sm:$0xff] %v278
    // Predicated region
    $region30: #{tpu_custom_call.1} parent=1 // pred_check
      _
    $region31: #{tpu_custom_call.1} parent=1 // pred_check_branch
      %284 = sbr.rel (0) target = $region33
    $region32: #{tpu_custom_call.1} parent=1 // pred_region
      %s286 = ssub.s32 256, 256
      %287 = vsyncadd [#allocation4], %s286
      %s288 = sshll.u32 [#allocation8], 4
      %s289 = int_to_ptr.vmem [resolvable:$true] %s288
      %294 = dma.vmem_to_hbm [thread:$0]  %s289, 256, %s4, [#allocation4], 128, 128, 8
    $region33: #{tpu_custom_call.1} parent=1 // pred_fallthru
      _
    // Predicated region
    $region34: #{tpu_custom_call.1} parent=1 // pred_check
      _
    $region35: #{tpu_custom_call.1} parent=1 // pred_check_branch
      %296 = sbr.rel (0) target = $region37
    $region36: #{tpu_custom_call.1} parent=1 // pred_region
      %297 = dma.done [#allocation4], 256
    $region37: #{tpu_custom_call.1} parent=1 // pred_fallthru
      _
    %298 = vsyncpa [#allocation3], 1
    %299 = vsyncpa [#allocation6], 1
    %300 = vsyncpa [#allocation4], 1

</llo_original>
